<compile_context>
chip_gen: v7x
topology: tpu7x:2x2x1
jax: 0.10.0
libtpu: 0.0.40
codegen_flags: <defaults>
</compile_context>

<pallas_src>
import jax
import jax.numpy as jnp
from jax.experimental import pallas as pl
from jax.experimental.pallas import tpu as pltpu


_FAST_PATH_BYTES = 256 << 10  # below this, a fused XLA add beats pallas_call dispatch


def _cdiv(a, b):
    return (a + b - 1) // b


def _vmem_limit_bytes():
    """Generation-aware scoped-VMEM request: ~3/4 of physical VMEM, capped at 96 MiB.

    v7x (64 MiB physical) -> ~48 MiB; v5e/v6e (128 MiB physical) -> 96 MiB.
    Falls back to the conservative v7x number if the query is unavailable.
    """
    cap = 64 << 20
    try:
        info = pltpu.get_tpu_info()
        cap = int(getattr(info, "vmem_capacity_bytes", cap) or cap)
    except Exception:
        pass
    return int(min((3 * cap) // 4, 96 << 20))


def _add_pos_kernel(x_ref, pos_ref, o_ref):
    # x_ref/o_ref: (tb, tr, C); pos_ref: (1, tr, C) -- full-vreg VPU add with a
    # broadcast over the folded batch dim.
    o_ref[...] = x_ref[...] + pos_ref[...]


def image_positional_embedding_for_each(image_patch_embeddings, image_patch_pos,
                                        *, force_pallas=False):
    """image_patch_embeddings: (B, Px, Py, D); image_patch_pos: (1, Px, Py, D)."""
    x = image_patch_embeddings
    pos = image_patch_pos
    if pos.ndim == 3:
        pos = pos[None]
    B, Px, Py, D = x.shape
    assert pos.shape == (1, Px, Py, D)
    if pos.dtype != x.dtype:
        pos = pos.astype(x.dtype)

    itemsize = jnp.dtype(x.dtype).itemsize

    # Tiny-input fast path: pallas_call fixed dispatch + grid overhead exceeds the
    # fused XLA add well below ~256 KiB of traffic.
    if not force_pallas and x.size * itemsize < _FAST_PATH_BYTES:
        return x + pos

    vmem_limit = _vmem_limit_bytes()
    slab_budget = max(1, vmem_limit // 6)  # x, out, pos each ~double-buffered

    # Dtype-aware sublane pack factor (f32 -> 8, bf16/f16 -> 16, int8/fp8 -> 32).
    sub = max(8, 32 // itemsize)

    # Lane-dense 3-D view (B, R, C).
    lane0 = Py * D
    N = Px * Py * D
    if lane0 % 128 == 0:
        R, C = Px, lane0
    elif N % 128 == 0 and N * itemsize <= slab_budget:
        R, C = 1, N           # one fully lane-dense (128-aligned) row per batch
    else:
        R, C = Px, lane0      # full-extent last dim: correct, masked tail per row

    x3 = x.reshape(B, R, C)
    pos3 = pos.reshape(1, R, C)

    # Row tile: largest multiple of `sub` whose single-batch slab fits the budget
    # (or the full extent -- always legal).
    row_bytes = C * itemsize
    tr = min(R, max(1, slab_budget // row_bytes))
    if tr < R:
        tr = (tr // sub) * sub
        if tr == 0:
            tr = R            # cannot tile legally below the sublane multiple
    n_r = _cdiv(R, tr)

    # Batch tile: fold batches into the slab until it reaches the budget.
    tb = min(B, max(1, slab_budget // max(1, tr * row_bytes)))
    # Keep >= 2 grid steps whenever possible so v7x's two TensorCores both get work.
    if n_r * _cdiv(B, tb) < 2 and B >= 2:
        tb = _cdiv(B, 2)
    n_b = _cdiv(B, tb)

    # Grid: (row-tiles, batch-tiles); batch is innermost so the pos block index only
    # changes per row-tile -> pos is fetched once per row-tile and stays VMEM-resident.
    grid = (n_r, n_b)

    out3 = pl.pallas_call(
        _add_pos_kernel,
        out_shape=jax.ShapeDtypeStruct((B, R, C), x.dtype),
        grid_spec=pltpu.PrefetchScalarGridSpec(
            num_scalar_prefetch=0,
            grid=grid,
            in_specs=[
                # x: one (tb, tr, C) slab per (row-tile, batch-tile).
                pl.BlockSpec((tb, tr, C), lambda i, b: (b, i, 0)),
                # pos: (1, tr, C); index depends only on the row-tile -> resident
                # across the inner batch loop (and the whole grid when n_r == 1).
                pl.BlockSpec((1, tr, C), lambda i, b: (0, i, 0)),
            ],
            out_specs=pl.BlockSpec((tb, tr, C), lambda i, b: (b, i, 0)),
        ),
        compiler_params=pltpu.CompilerParams(
            dimension_semantics=("parallel", "parallel"),
            vmem_limit_bytes=vmem_limit,
        ),
    )(x3, pos3)

    return out3.reshape(B, Px, Py, D)


def reference(x, pos):
    # Pure-JAX reference of the PyTorch forward (broadcast add over batch).
    return x + pos


if __name__ == "__main__":
    # Small shapes consistent with the module: B=2, Px=8, Py=8, D=32.
    B, Px, Py, D = 2, 8, 8, 32

    key = jax.random.PRNGKey(0)
    k_x, k_pos = jax.random.split(key, 2)

    x = jax.random.normal(k_x, (B, Px, Py, D), dtype=jnp.float32)
    # nn.init.normal_(..., std=0.02) equivalent, deterministic in-script.
    pos = 0.02 * jax.random.normal(k_pos, (1, Px, Py, D), dtype=jnp.float32)

    ref = reference(x, pos)

    # Exercise the Pallas kernel (the shape is tiny, so force past the fast path).
    out = image_positional_embedding_for_each(x, pos, force_pallas=True)
    out = jax.block_until_ready(out)
    assert out.shape == (B, Px, Py, D)
    assert out.dtype == x.dtype
    assert jnp.allclose(out, ref, atol=1e-6, rtol=1e-6)

    # Also sanity-check the default dispatch (small-size fast path).
    out_fast = jax.block_until_ready(image_positional_embedding_for_each(x, pos))
    assert jnp.allclose(out_fast, ref, atol=1e-6, rtol=1e-6)

    print("KERNEL_OK")
</pallas_src>

<mosaic_0001>
module attributes {stable_mosaic.version = 11 : i64} {
  func.func @_add_pos_kernel(%arg0: i32, %arg1: i32, %arg2: memref<1x8x256xf32, #tpu.memory_space<vmem>>, %arg3: memref<1x8x256xf32, #tpu.memory_space<vmem>>, %arg4: memref<1x8x256xf32, #tpu.memory_space<vmem>>) attributes {dimension_semantics = [#tpu.dimension_semantics<parallel>, #tpu.dimension_semantics<parallel>], iteration_bounds = array<i64: 1, 2>, scalar_prefetch = 0 : i64, scratch_operands = 0 : i64, tpu.core_type = #tpu.core_type<tc>, window_params = [{transform_indices = @transform_0, window_bounds = array<i64: 1, 8, 256>}, {transform_indices = @transform_1, window_bounds = array<i64: 1, 8, 256>}, {transform_indices = @transform_2, window_bounds = array<i64: 1, 8, 256>}]} {
    %c0 = arith.constant 0 : index
    %c0_0 = arith.constant 0 : index
    %c0_1 = arith.constant 0 : index
    %0 = vector.load %arg2[%c0, %c0_0, %c0_1] : memref<1x8x256xf32, #tpu.memory_space<vmem>>, vector<1x8x256xf32>
    %c0_2 = arith.constant 0 : index
    %c0_3 = arith.constant 0 : index
    %c0_4 = arith.constant 0 : index
    %1 = vector.load %arg3[%c0_2, %c0_3, %c0_4] : memref<1x8x256xf32, #tpu.memory_space<vmem>>, vector<1x8x256xf32>
    %2 = arith.addf %0, %1 : vector<1x8x256xf32>
    %c0_5 = arith.constant 0 : index
    %c0_6 = arith.constant 0 : index
    %c0_7 = arith.constant 0 : index
    %3 = vector.load %arg4[%c0_5, %c0_6, %c0_7] : memref<1x8x256xf32, #tpu.memory_space<vmem>>, vector<1x8x256xf32>
    tpu.vector_store %arg4[%c0_5, %c0_6, %c0_7], %2 {strides = array<i32>} : memref<1x8x256xf32, #tpu.memory_space<vmem>>, vector<1x8x256xf32>,
    return
  }
  func.func @transform_0(%arg0: i32, %arg1: i32) -> (i32, i32, i32) {
    %c0_i32 = arith.constant 0 : i32
    %c0_i32_0 = arith.constant 0 : i32
    return %arg1, %arg0, %c0_i32 : i32, i32, i32
  }
  func.func @transform_1(%arg0: i32, %arg1: i32) -> (i32, i32, i32) {
    %c0_i32 = arith.constant 0 : i32
    %c0_i32_0 = arith.constant 0 : i32
    %c0_i32_1 = arith.constant 0 : i32
    return %c0_i32, %arg0, %c0_i32_0 : i32, i32, i32
  }
  func.func @transform_2(%arg0: i32, %arg1: i32) -> (i32, i32, i32) {
    %c0_i32 = arith.constant 0 : i32
    %c0_i32_0 = arith.constant 0 : i32
    return %arg1, %arg0, %c0_i32 : i32, i32, i32
  }
}

</mosaic_0001>

<llo_original>
// kernel: tpu_custom_call.1
$region0: #{tpu_custom_call.1}
  #allocation0 [shape = 'u32[]', space=smem, size = 0x4, offset = 0x4, fixed_abs, tag = 'smem constant byte address 0x4 - core index']
  #allocation1 [shape = 'u32[144,128]{1,0:T(1,128)}', space=vmem, size = 0x12000, scoped, tag = 'internal scratch']
  %s0 = inlined_call_operand.hbm [shape: f32[2,8,256], index: 0, kind: input, shape index: {}]
  %s1 = inlined_call_operand.hbm [shape: f32[1,8,256], index: 1, kind: input, shape index: {}]
  %s2 = inlined_call_operand.hbm [shape: f32[2,8,256], index: 2, kind: output, shape index: {}]
  %s3 = sld [smem:[#allocation0]]
  $region49: #{tpu_custom_call.1} parent=0
    _
  %s5 = ssub.s32 1, %s3
  %s6 = scalar_select 0, %s5, %s3
  $region1: #{tpu_custom_call.1} parent=0
    #allocation2 [shape = 'u8[16384]{0}', space=vmem, size = 0x4000, scoped, tag = 'input window, operand 0']
    #allocation3 [shape = 's32[2]{0}', space=sflag, size = 0x8, scoped, tag = 'scoped memory for tpu_custom_call.1']
    #allocation4 [shape = 's32[2]{0}', space=sflag, size = 0x8, scoped, tag = 'scoped memory for tpu_custom_call.1']
    #allocation5 [shape = 'u8[8192]{0}', space=vmem, size = 0x2000, scoped, tag = 'input window, operand 1, single buffered']
    #allocation6 [shape = 's32[1]{0}', space=sflag, size = 0x4, scoped, tag = 'scoped memory for tpu_custom_call.1']
    #allocation7 [shape = 'u8[16384]{0}', space=vmem, size = 0x4000, scoped, tag = 'output window, operand 0']
    %7 = vsyncpa [#allocation3], 0
    %s8 = scalar_lea.sflag [#allocation3], 1
    %9 = vsyncpa %s8, 0
    %10 = vsyncpa [#allocation6], 0
    %11 = vsyncpa [#allocation4], 0
    %s12 = scalar_lea.sflag [#allocation4], 1
    %13 = vsyncpa %s12, 0
    loop: start=0, step=1, limit=4
    $region2: #{tpu_custom_call.1} parent=1 // loop_pre_header
      _
    $region3: #{tpu_custom_call.1} parent=1 // loop_header
      %s15 = sphi 0, %s19
      %p16 = scmp.ge.s32.totalorder %s15, 4
      %s22 = sphi 0, %s34
      %s23 = sphi 0, %s30
      %s24 = sphi 0, %s22
      %s25 = sphi 0, %s23
      %s26 = sphi 0, %s24
      %s27 = sphi 0, %s25
      %s39 = sphi 0, %s41
      %s42 = sphi 0, %s39
      %s43 = sphi 0, %s42
      %s59 = sphi 0, %s43
      %s65 = sphi 0, %s67
      %s68 = sphi 0, %s65
      %s69 = sphi 0, %s68
      %s85 = sphi 0, %s69
      %s93 = sphi 0, %s95
      %s96 = sphi 0, %s93
      %s97 = sphi 0, %s96
      %s113 = sphi 0, %s97
    $region4: #{tpu_custom_call.1} parent=1 // loop_header_branch
      %18 = sbr.rel (%p16) target = $region8
    $region5: #{tpu_custom_call.1} parent=1 // loop_body
      %s20 = ssub.s32 %s15, 1
      %s21 = ssub.s32 %s15, 2
      %s28 = sadd.s32 1, %s23
      %p29 = scmp.ge.s32.totalorder %s28, 2
      %s30 = scalar_select %p29, 0, %s28
      %s31 = sadd.s32 1, %s22
      %s32 = scalar_select %p29, %s31, %s22
      %p33 = scmp.ge.s32.totalorder %s32, 1
      %s34 = scalar_select %p33, 0, %s32
      %s35 = ssub.s32 %s23, %s30
      %s36 = ssub.s32 %s22, %s34
      %s37 = sor.u32 %s35, %s36
      %p38 = scmp.eq.s32.totalorder %s37, 0
      %s40 = sadd.s32 %s39, 1
      %s41 = scalar_select %p38, %s39, %s40
      %p44 = pneg %p38
      %p45 = scmp.eq.s32.totalorder %s15, 1
      %p46 = por %p44, %p45
      %p47 = scmp.ne.s32.totalorder %s39, %s42
      %p48 = scmp.eq.s32.totalorder %s15, 0
      %p49 = por %p47, %p48
      %p50 = scmp.ne.s32.totalorder %s39, %s42
      %p51 = scmp.eq.s32.totalorder %s20, 1
      %p52 = por %p50, %p51
      %p53 = scmp.ne.s32.totalorder %s42, %s43
      %p54 = scmp.eq.s32.totalorder %s20, 0
      %p55 = por %p53, %p54
      %p56 = scmp.ne.s32.totalorder %s42, %s43
      %p57 = scmp.eq.s32.totalorder %s21, 1
      %p58 = por %p56, %p57
      %p60 = scmp.ne.s32.totalorder %s43, %s59
      %p61 = scmp.eq.s32.totalorder %s21, 0
      %p62 = por %p60, %p61
      %s63 = ssub.s32 %s22, %s34
      %p64 = scmp.eq.s32.totalorder %s63, 0
      %s66 = sadd.s32 %s65, 1
      %s67 = scalar_select %p64, %s65, %s66
      %p70 = pneg %p64
      %p71 = scmp.eq.s32.totalorder %s15, 1
      %p72 = por %p70, %p71
      %p73 = scmp.ne.s32.totalorder %s65, %s68
      %p74 = scmp.eq.s32.totalorder %s15, 0
      %p75 = por %p73, %p74
      %p76 = scmp.ne.s32.totalorder %s65, %s68
      %p77 = scmp.eq.s32.totalorder %s20, 1
      %p78 = por %p76, %p77
      %p79 = scmp.ne.s32.totalorder %s68, %s69
      %p80 = scmp.eq.s32.totalorder %s20, 0
      %p81 = por %p79, %p80
      %p82 = scmp.ne.s32.totalorder %s68, %s69
      %p83 = scmp.eq.s32.totalorder %s21, 1
      %p84 = por %p82, %p83
      %p86 = scmp.ne.s32.totalorder %s69, %s85
      %p87 = scmp.eq.s32.totalorder %s21, 0
      %p88 = por %p86, %p87
      %s89 = ssub.s32 %s23, %s30
      %s90 = ssub.s32 %s22, %s34
      %s91 = sor.u32 %s89, %s90
      %p92 = scmp.eq.s32.totalorder %s91, 0
      %s94 = sadd.s32 %s93, 1
      %s95 = scalar_select %p92, %s93, %s94
      %p98 = pneg %p92
      %p99 = scmp.eq.s32.totalorder %s15, 1
      %p100 = por %p98, %p99
      %p101 = scmp.ne.s32.totalorder %s93, %s96
      %p102 = scmp.eq.s32.totalorder %s15, 0
      %p103 = por %p101, %p102
      %p104 = scmp.ne.s32.totalorder %s93, %s96
      %p105 = scmp.eq.s32.totalorder %s20, 1
      %p106 = por %p104, %p105
      %p107 = scmp.ne.s32.totalorder %s96, %s97
      %p108 = scmp.eq.s32.totalorder %s20, 0
      %p109 = por %p107, %p108
      %p110 = scmp.ne.s32.totalorder %s96, %s97
      %p111 = scmp.eq.s32.totalorder %s21, 1
      %p112 = por %p110, %p111
      %p114 = scmp.ne.s32.totalorder %s97, %s113
      %p115 = scmp.eq.s32.totalorder %s21, 0
      %p116 = por %p114, %p115
      %p117 = scmp.le.s32.totalorder 1, %s15
      %p118 = scmp.lt.s32.totalorder %s15, 3
      %p119 = pnand %p117, %p118
      %p120 = pneg %p119
      // Predicated region
      $region9: #{tpu_custom_call.1} parent=5 // pred_check
        _
      $region10: #{tpu_custom_call.1} parent=5 // pred_check_branch
        %122 = sbr.rel (%p119) target = $region12
      $region11: #{tpu_custom_call.1} parent=5 // pred_region
        %s123 = ssub.s32 %s15, 1
        // Predicated region
        $region13: #{tpu_custom_call.1} parent=11 // pred_check
          %p124 = pneg %p81
        $region14: #{tpu_custom_call.1} parent=11 // pred_check_branch
          %126 = sbr.rel (%p124) target = $region16
        $region15: #{tpu_custom_call.1} parent=11 // pred_region
          %s128 = ssub.s32 256, 256
          %129 = vsyncadd [#allocation6], %s128
          %s130 = smul.addr %s24, 2
          %s131 = smul.addr %s130, 128
          %s132 = scalar_lea.hbm %s1, %s131
          %s134 = sshll.u32 [#allocation5], 4
          %s135 = int_to_ptr.vmem [resolvable:$true] %s134
          %137 = dma.hbm_to_vmem [thread:$0]  %s132, 256, %s135, [#allocation6]
        $region16: #{tpu_custom_call.1} parent=11 // pred_fallthru
          _
      $region12: #{tpu_custom_call.1} parent=5 // pred_fallthru
        _
      %p138 = scmp.lt.s32.totalorder %s15, 2
      // Predicated region
      $region17: #{tpu_custom_call.1} parent=5 // pred_check
        %p139 = pneg %p138
      $region18: #{tpu_custom_call.1} parent=5 // pred_check_branch
        %141 = sbr.rel (%p139) target = $region20
      $region19: #{tpu_custom_call.1} parent=5 // pred_region
        // Predicated region
        $region21: #{tpu_custom_call.1} parent=19 // pred_check
          %p142 = pneg %p49
        $region22: #{tpu_custom_call.1} parent=19 // pred_check_branch
          %144 = sbr.rel (%p142) target = $region24
        $region23: #{tpu_custom_call.1} parent=19 // pred_region
          %s145 = sand.u32 %s39, 1
          %s146 = scalar_lea.sflag [#allocation3], %s145
          %s147 = sand.u32 %s39, 1
          %s148 = smul.addr %s147, 16
          %s149 = scalar_lea.vmem [#allocation2], %s148
          %s151 = ssub.s32 256, 256
          %152 = vsyncadd %s146, %s151
          %s153 = smul.addr %s22, 2
          %s154 = smul.addr %s23, 2
          %s155 = sadd.s32 %s153, %s154
          %s156 = smul.addr %s155, 128
          %s157 = scalar_lea.hbm %s0, %s156
          %s159 = sshll.u32 %s149, 4
          %s160 = int_to_ptr.vmem [resolvable:$true] %s159
          %162 = dma.hbm_to_vmem [thread:$0]  %s157, 256, %s160, %s146
        $region24: #{tpu_custom_call.1} parent=19 // pred_fallthru
          _
      $region20: #{tpu_custom_call.1} parent=5 // pred_fallthru
        _
      %p163 = scmp.le.s32.totalorder 1, %s15
      %p164 = scmp.lt.s32.totalorder %s15, 3
      %p165 = pnand %p163, %p164
      %p166 = pneg %p165
      // Predicated region
      $region25: #{tpu_custom_call.1} parent=5 // pred_check
        _
      $region26: #{tpu_custom_call.1} parent=5 // pred_check_branch
        %168 = sbr.rel (%p165) target = $region28
      $region27: #{tpu_custom_call.1} parent=5 // pred_region
        %s169 = ssub.s32 %s15, 1
        %s170 = sand.u32 %s42, 1
        %s171 = scalar_lea.sflag [#allocation3], %s170
        %s172 = sand.u32 %s42, 1
        %s173 = smul.addr %s172, 16
        %s174 = scalar_lea.vmem [#allocation2], %s173
        // Predicated region
        $region29: #{tpu_custom_call.1} parent=27 // pred_check
          %p175 = pneg %p55
        $region30: #{tpu_custom_call.1} parent=27 // pred_check_branch
          %177 = sbr.rel (%p175) target = $region32
        $region31: #{tpu_custom_call.1} parent=27 // pred_region
          %178 = dma.done %s171, 256
        $region32: #{tpu_custom_call.1} parent=27 // pred_fallthru
          _
        // Predicated region
        $region33: #{tpu_custom_call.1} parent=27 // pred_check
          %p179 = pneg %p81
        $region34: #{tpu_custom_call.1} parent=27 // pred_check_branch
          %181 = sbr.rel (%p179) target = $region36
        $region35: #{tpu_custom_call.1} parent=27 // pred_region
          %182 = dma.done [#allocation6], 256
        $region36: #{tpu_custom_call.1} parent=27 // pred_fallthru
          _
        %s183 = sand.u32 %s42, 1
        %s184 = scalar_lea.sflag [#allocation3], %s183
        %s185 = sand.u32 %s42, 1
        %s186 = smul.addr %s185, 16
        %s187 = scalar_lea.vmem [#allocation2], %s186
        %p188 = pneg %p55
        %p189 = pneg %p52
        %p190 = pneg %p81
        %p191 = pneg %p78
        %p192 = pneg %p109
        %p193 = pneg %p106
        %s194 = sand.u32 %s96, 1
        %s195 = scalar_lea.sflag [#allocation4], %s194
        %s196 = sand.u32 %s96, 1
        %s197 = smul.addr %s196, 16
        %s198 = scalar_lea.vmem [#allocation7], %s197
        %v199 = vld [vmem:[%s174] sm:$0xff]
        %v200 = vld [vmem:[%s174 + $0x8] sm:$0xff]
        %v201 = vld [vmem:[#allocation5] sm:$0xff]
        %v202 = vld [vmem:[#allocation5 + $0x8] sm:$0xff]
        %v203 = vadd.f32 %v199, %v201
        %v204 = vadd.f32 %v200, %v202
        %205 = vst [vmem:[%s198] sm:$0xff] %v203
        %206 = vst [vmem:[%s198 + $0x8] sm:$0xff] %v204
        %s207 = sand.u32 %s96, 1
        %s208 = scalar_lea.sflag [#allocation4], %s207
        %s209 = sand.u32 %s96, 1
        %s210 = smul.addr %s209, 16
        %s211 = scalar_lea.vmem [#allocation7], %s210
        // Predicated region
        $region37: #{tpu_custom_call.1} parent=27 // pred_check
          %p212 = pneg %p106
        $region38: #{tpu_custom_call.1} parent=27 // pred_check_branch
          %214 = sbr.rel (%p212) target = $region40
        $region39: #{tpu_custom_call.1} parent=27 // pred_region
          %s216 = ssub.s32 256, 256
          %217 = vsyncadd %s208, %s216
          %s218 = smul.addr %s24, 2
          %s219 = smul.addr %s25, 2
          %s220 = sadd.s32 %s218, %s219
          %s221 = smul.addr %s220, 128
          %s222 = scalar_lea.hbm %s2, %s221
          %s224 = sshll.u32 %s211, 4
          %s225 = int_to_ptr.vmem [resolvable:$true] %s224
          %227 = dma.vmem_to_hbm [thread:$0]  %s225, 256, %s222, %s208
        $region40: #{tpu_custom_call.1} parent=27 // pred_fallthru
          _
      $region28: #{tpu_custom_call.1} parent=5 // pred_fallthru
        _
      %p228 = scmp.le.s32.totalorder 2, %s15
      // Predicated region
      $region41: #{tpu_custom_call.1} parent=5 // pred_check
        %p229 = pneg %p228
      $region42: #{tpu_custom_call.1} parent=5 // pred_check_branch
        %231 = sbr.rel (%p229) target = $region44
      $region43: #{tpu_custom_call.1} parent=5 // pred_region
        %s232 = ssub.s32 %s15, 2
        // Predicated region
        $region45: #{tpu_custom_call.1} parent=43 // pred_check
          %p233 = pneg %p112
        $region46: #{tpu_custom_call.1} parent=43 // pred_check_branch
          %235 = sbr.rel (%p233) target = $region48
        $region47: #{tpu_custom_call.1} parent=43 // pred_region
          %s236 = sand.u32 %s97, 1
          %s237 = scalar_lea.sflag [#allocation4], %s236
          %s238 = sand.u32 %s97, 1
          %s239 = smul.addr %s238, 16
          %s240 = scalar_lea.vmem [#allocation7], %s239
          %241 = dma.done %s237, 256
        $region48: #{tpu_custom_call.1} parent=43 // pred_fallthru
          _
      $region44: #{tpu_custom_call.1} parent=5 // pred_fallthru
        _
    $region6: #{tpu_custom_call.1} parent=1 // loop_footer
      %s19 = sadd.s32 1, %s15
    $region7: #{tpu_custom_call.1} parent=1 // loop_footer_branch
      %14 = sbr.rel target = $region3
    $region8: #{tpu_custom_call.1} parent=1 // loop_exit
      _
    %242 = vsyncpa [#allocation3], 1
    %s243 = scalar_lea.sflag [#allocation3], 1
    %244 = vsyncpa %s243, 1
    %245 = vsyncpa [#allocation6], 1
    %246 = vsyncpa [#allocation4], 1
    %s247 = scalar_lea.sflag [#allocation4], 1
    %248 = vsyncpa %s247, 1

</llo_original>
